<compile_context>
chip_gen: v6e
topology: v6e:2x2x1
jax: 0.10.0
libtpu: 0.0.40
codegen_flags: <defaults>
</compile_context>

<pallas_src>
import functools

import jax
import jax.numpy as jnp
from jax.experimental import pallas as pl
from jax.experimental.pallas import tpu as pltpu


def _round_up(x, m):
    return ((x + m - 1) // m) * m


def generator_kernel(x_ref, w1_ref, b1_ref, w2_ref, b2_ref, w3_ref, b3_ref, o_ref):
    # Layer 1: Linear + ReLU  (bf16 MXU inputs, f32 accumulation)
    h1 = jnp.dot(x_ref[...], w1_ref[...], preferred_element_type=jnp.float32)
    h1 = jnp.maximum(h1 + b1_ref[...], 0.0).astype(jnp.bfloat16)
    # Layer 2: Linear + ReLU
    h2 = jnp.dot(h1, w2_ref[...], preferred_element_type=jnp.float32)
    h2 = jnp.maximum(h2 + b2_ref[...], 0.0).astype(jnp.bfloat16)
    # Layer 3: Linear + tanh
    h3 = jnp.dot(h2, w3_ref[...], preferred_element_type=jnp.float32)
    o_ref[...] = jnp.tanh(h3 + b3_ref[...]).astype(o_ref.dtype)


@functools.partial(jax.jit, static_argnames=("batch_tile",))
def generator_forward(x, params, *, batch_tile=256):
    """x: [B, latentSize] float32 -> [B, imageSize] float32.

    params: (w1, b1, w2, b2, w3, b3) with weights stored [in_features, out_features]
    (transpose of PyTorch's [out, in]) and biases as [1, out_features], all float32.
    """
    w1, b1, w2, b2, w3, b3 = params
    B, latent = x.shape
    h1_dim = w1.shape[1]
    h2_dim = w2.shape[1]
    image_size = w3.shape[1]

    # Pad every contraction / feature dim to a multiple of 128 (lane width) so the
    # MXU sees fully dense tiles.  Padded rows/cols are zeros -> results unchanged.
    K = _round_up(latent, 128)        # 64  -> 128
    H1 = _round_up(h1_dim, 128)       # 200 -> 256
    H2 = _round_up(h2_dim, 128)       # 400 -> 512
    N = _round_up(image_size, 128)

    # Batch tiling: at most `batch_tile` rows per grid step, tile a multiple of 8
    # (sublane), batch zero-padded up to tile * num_tiles and sliced back afterwards.
    num_tiles = max(1, -(-B // batch_tile))
    tile = _round_up(-(-B // num_tiles), 8)
    padded_B = tile * num_tiles

    def pad2(a, rows, cols, dtype):
        return jnp.pad(a, ((0, rows - a.shape[0]), (0, cols - a.shape[1]))).astype(dtype)

    xp = pad2(x, padded_B, K, jnp.bfloat16)
    w1p = pad2(w1, K, H1, jnp.bfloat16)
    b1p = pad2(b1, 1, H1, jnp.float32)
    w2p = pad2(w2, H1, H2, jnp.bfloat16)
    b2p = pad2(b2, 1, H2, jnp.float32)
    w3p = pad2(w3, H2, N, jnp.bfloat16)
    b3p = pad2(b3, 1, N, jnp.float32)

    out = pl.pallas_call(
        generator_kernel,
        out_shape=jax.ShapeDtypeStruct((padded_B, N), jnp.float32),
        grid_spec=pltpu.PrefetchScalarGridSpec(
            num_scalar_prefetch=0,
            grid=(num_tiles,),
            in_specs=[
                pl.BlockSpec((tile, K), lambda i: (i, 0)),   # x tile
                pl.BlockSpec((K, H1), lambda i: (0, 0)),     # W1
                pl.BlockSpec((1, H1), lambda i: (0, 0)),     # b1
                pl.BlockSpec((H1, H2), lambda i: (0, 0)),    # W2
                pl.BlockSpec((1, H2), lambda i: (0, 0)),     # b2
                pl.BlockSpec((H2, N), lambda i: (0, 0)),     # W3
                pl.BlockSpec((1, N), lambda i: (0, 0)),      # b3
            ],
            out_specs=pl.BlockSpec((tile, N), lambda i: (i, 0)),
        ),
        compiler_params=pltpu.CompilerParams(
            dimension_semantics=("parallel",),
            vmem_limit_bytes=48 * 1024 * 1024,
        ),
    )(xp, w1p, b1p, w2p, b2p, w3p, b3p)

    return out[:B, :image_size]


def init_params(key, latent_size, image_size):
    """Deterministic init matching nn.Linear shapes (weights stored [in, out])."""
    dims = [(latent_size, 200), (200, 400), (400, image_size)]
    params = []
    for i, (fan_in, fan_out) in enumerate(dims):
        kw, kb = jax.random.split(jax.random.fold_in(key, i))
        bound = 1.0 / jnp.sqrt(fan_in)
        w = jax.random.uniform(kw, (fan_in, fan_out), jnp.float32, -bound, bound)
        b = jax.random.uniform(kb, (1, fan_out), jnp.float32, -bound, bound)
        params += [w, b]
    return tuple(params)


def reference_forward(x, params):
    w1, b1, w2, b2, w3, b3 = params
    h = jnp.maximum(x @ w1 + b1, 0.0)
    h = jnp.maximum(h @ w2 + b2, 0.0)
    return jnp.tanh(h @ w3 + b3)


if __name__ == "__main__":
    latent_size = 64
    image_size = 256

    key = jax.random.PRNGKey(0)
    k_p, k_x1, k_x2 = jax.random.split(key, 3)
    params = init_params(k_p, latent_size, image_size)

    # Case 1: small batch (matches the original GAN demo usage).
    x_small = jax.random.normal(k_x1, (8, latent_size), dtype=jnp.float32)
    out_small = jax.block_until_ready(generator_forward(x_small, params))
    ref_small = reference_forward(x_small, params)
    assert out_small.shape == (8, image_size)
    assert jnp.allclose(out_small, ref_small, atol=3e-2, rtol=3e-2), (
        float(jnp.max(jnp.abs(out_small - ref_small))))

    # Case 2: larger ragged batch — exercises the 256-row MXU tile, batch padding,
    # and a multi-step parallel grid (both TensorCores on v7x).
    x_big = jax.random.normal(k_x2, (500, latent_size), dtype=jnp.float32)
    out_big = jax.block_until_ready(generator_forward(x_big, params))
    ref_big = reference_forward(x_big, params)
    assert out_big.shape == (500, image_size)
    assert jnp.allclose(out_big, ref_big, atol=3e-2, rtol=3e-2), (
        float(jnp.max(jnp.abs(out_big - ref_big))))

    print("KERNEL_OK")
</pallas_src>

<mosaic_0001>
module attributes {stable_mosaic.version = 11 : i64} {
  func.func @generator_kernel(%arg0: i32, %arg1: memref<8x128xbf16, #tpu.memory_space<vmem>>, %arg2: memref<128x256xbf16, #tpu.memory_space<vmem>>, %arg3: memref<1x256xf32, #tpu.memory_space<vmem>>, %arg4: memref<256x512xbf16, #tpu.memory_space<vmem>>, %arg5: memref<1x512xf32, #tpu.memory_space<vmem>>, %arg6: memref<512x256xbf16, #tpu.memory_space<vmem>>, %arg7: memref<1x256xf32, #tpu.memory_space<vmem>>, %arg8: memref<8x256xf32, #tpu.memory_space<vmem>>) attributes {dimension_semantics = [#tpu.dimension_semantics<parallel>], iteration_bounds = array<i64: 1>, scalar_prefetch = 0 : i64, scratch_operands = 0 : i64, tpu.core_type = #tpu.core_type<tc>, window_params = [{transform_indices = @transform_0, window_bounds = array<i64: 8, 128>}, {pipeline_mode = #tpu.pipeline_mode<synchronous>, transform_indices = @transform_1, window_bounds = array<i64: 128, 256>}, {pipeline_mode = #tpu.pipeline_mode<synchronous>, transform_indices = @transform_2, window_bounds = array<i64: 1, 256>}, {pipeline_mode = #tpu.pipeline_mode<synchronous>, transform_indices = @transform_3, window_bounds = array<i64: 256, 512>}, {pipeline_mode = #tpu.pipeline_mode<synchronous>, transform_indices = @transform_4, window_bounds = array<i64: 1, 512>}, {pipeline_mode = #tpu.pipeline_mode<synchronous>, transform_indices = @transform_5, window_bounds = array<i64: 512, 256>}, {pipeline_mode = #tpu.pipeline_mode<synchronous>, transform_indices = @transform_6, window_bounds = array<i64: 1, 256>}, {transform_indices = @transform_7, window_bounds = array<i64: 8, 256>}]} {
    %c0 = arith.constant 0 : index
    %c0_0 = arith.constant 0 : index
    %0 = vector.load %arg1[%c0, %c0_0] : memref<8x128xbf16, #tpu.memory_space<vmem>>, vector<8x128xbf16>
    %c0_1 = arith.constant 0 : index
    %c0_2 = arith.constant 0 : index
    %1 = vector.load %arg2[%c0_1, %c0_2] : memref<128x256xbf16, #tpu.memory_space<vmem>>, vector<128x256xbf16>
    %cst = arith.constant dense<0.000000e+00> : vector<8x256xf32>
    %2 = tpu.matmul %0, %1, %cst {dimension_numbers = #tpu.dot_dimension_numbers<[1], [0], [0], [1], [0, 0, 1, 1], [], []>} : vector<8x128xbf16>, vector<128x256xbf16>, vector<8x256xf32> -> vector<8x256xf32>
    %c0_3 = arith.constant 0 : index
    %c0_4 = arith.constant 0 : index
    %3 = vector.load %arg3[%c0_3, %c0_4] : memref<1x256xf32, #tpu.memory_space<vmem>>, vector<1x256xf32>
    %4 = vector.broadcast %3 : vector<1x256xf32> to vector<8x256xf32>
    %5 = arith.addf %2, %4 : vector<8x256xf32>
    %cst_5 = arith.constant 0.000000e+00 : f32
    %6 = vector.broadcast %cst_5 : f32 to vector<8x256xf32>
    %7 = arith.maximumf %5, %6 : vector<8x256xf32>
    %8 = arith.truncf %7 : vector<8x256xf32> to vector<8x256xbf16>
    %c0_6 = arith.constant 0 : index
    %c0_7 = arith.constant 0 : index
    %9 = vector.load %arg4[%c0_6, %c0_7] : memref<256x512xbf16, #tpu.memory_space<vmem>>, vector<256x512xbf16>
    %cst_8 = arith.constant dense<0.000000e+00> : vector<8x512xf32>
    %10 = tpu.matmul %8, %9, %cst_8 {dimension_numbers = #tpu.dot_dimension_numbers<[1], [0], [0], [1], [0, 0, 1, 1], [], []>} : vector<8x256xbf16>, vector<256x512xbf16>, vector<8x512xf32> -> vector<8x512xf32>
    %c0_9 = arith.constant 0 : index
    %c0_10 = arith.constant 0 : index
    %11 = vector.load %arg5[%c0_9, %c0_10] : memref<1x512xf32, #tpu.memory_space<vmem>>, vector<1x512xf32>
    %12 = vector.broadcast %11 : vector<1x512xf32> to vector<8x512xf32>
    %13 = arith.addf %10, %12 : vector<8x512xf32>
    %cst_11 = arith.constant 0.000000e+00 : f32
    %14 = vector.broadcast %cst_11 : f32 to vector<8x512xf32>
    %15 = arith.maximumf %13, %14 : vector<8x512xf32>
    %16 = arith.truncf %15 : vector<8x512xf32> to vector<8x512xbf16>
    %c0_12 = arith.constant 0 : index
    %c0_13 = arith.constant 0 : index
    %17 = vector.load %arg6[%c0_12, %c0_13] : memref<512x256xbf16, #tpu.memory_space<vmem>>, vector<512x256xbf16>
    %cst_14 = arith.constant dense<0.000000e+00> : vector<8x256xf32>
    %18 = tpu.matmul %16, %17, %cst_14 {dimension_numbers = #tpu.dot_dimension_numbers<[1], [0], [0], [1], [0, 0, 1, 1], [], []>} : vector<8x512xbf16>, vector<512x256xbf16>, vector<8x256xf32> -> vector<8x256xf32>
    %c0_15 = arith.constant 0 : index
    %c0_16 = arith.constant 0 : index
    %19 = vector.load %arg7[%c0_15, %c0_16] : memref<1x256xf32, #tpu.memory_space<vmem>>, vector<1x256xf32>
    %20 = vector.broadcast %19 : vector<1x256xf32> to vector<8x256xf32>
    %21 = arith.addf %18, %20 : vector<8x256xf32>
    %22 = math.tanh %21 : vector<8x256xf32>
    %c0_17 = arith.constant 0 : index
    %c0_18 = arith.constant 0 : index
    %23 = vector.load %arg8[%c0_17, %c0_18] : memref<8x256xf32, #tpu.memory_space<vmem>>, vector<8x256xf32>
    tpu.vector_store %arg8[%c0_17, %c0_18], %22 {strides = array<i32>} : memref<8x256xf32, #tpu.memory_space<vmem>>, vector<8x256xf32>,
    return
  }
  func.func @transform_0(%arg0: i32) -> (i32, i32) {
    %c0_i32 = arith.constant 0 : i32
    %c0_i32_0 = arith.constant 0 : i32
    return %arg0, %c0_i32 : i32, i32
  }
  func.func @transform_1(%arg0: i32) -> (i32, i32) {
    %c0_i32 = arith.constant 0 : i32
    %c0_i32_0 = arith.constant 0 : i32
    %c0_i32_1 = arith.constant 0 : i32
    return %c0_i32, %c0_i32_0 : i32, i32
  }
  func.func @transform_2(%arg0: i32) -> (i32, i32) {
    %c0_i32 = arith.constant 0 : i32
    %c0_i32_0 = arith.constant 0 : i32
    %c0_i32_1 = arith.constant 0 : i32
    return %c0_i32, %c0_i32_0 : i32, i32
  }
  func.func @transform_3(%arg0: i32) -> (i32, i32) {
    %c0_i32 = arith.constant 0 : i32
    %c0_i32_0 = arith.constant 0 : i32
    %c0_i32_1 = arith.constant 0 : i32
    return %c0_i32, %c0_i32_0 : i32, i32
  }
  func.func @transform_4(%arg0: i32) -> (i32, i32) {
    %c0_i32 = arith.constant 0 : i32
    %c0_i32_0 = arith.constant 0 : i32
    %c0_i32_1 = arith.constant 0 : i32
    return %c0_i32, %c0_i32_0 : i32, i32
  }
  func.func @transform_5(%arg0: i32) -> (i32, i32) {
    %c0_i32 = arith.constant 0 : i32
    %c0_i32_0 = arith.constant 0 : i32
    %c0_i32_1 = arith.constant 0 : i32
    return %c0_i32, %c0_i32_0 : i32, i32
  }
  func.func @transform_6(%arg0: i32) -> (i32, i32) {
    %c0_i32 = arith.constant 0 : i32
    %c0_i32_0 = arith.constant 0 : i32
    %c0_i32_1 = arith.constant 0 : i32
    return %c0_i32, %c0_i32_0 : i32, i32
  }
  func.func @transform_7(%arg0: i32) -> (i32, i32) {
    %c0_i32 = arith.constant 0 : i32
    %c0_i32_0 = arith.constant 0 : i32
    return %arg0, %c0_i32 : i32, i32
  }
}

</mosaic_0001>

<llo_original>
// kernel: generator_forward.1
$region0: #{generator_forward.1}
  #allocation0 [shape = 'u32[]', space=smem, size = 0x4, offset = 0x4, fixed_abs, tag = 'smem constant byte address 0x4 - core index']
  #allocation1 [shape = 'u32[144,128]{1,0:T(1,128)}', space=vmem, size = 0x12000, scoped, tag = 'internal scratch']
  %s0 = inlined_call_operand.vmem [shape: bf16[8,128], index: 0, kind: input, shape index: {}]
  %s1 = inlined_call_operand.vmem [shape: bf16[128,256], index: 1, kind: input, shape index: {}]
  %s2 = inlined_call_operand.vmem [shape: f32[1,256], index: 2, kind: input, shape index: {}]
  %s3 = inlined_call_operand.vmem [shape: bf16[256,512], index: 3, kind: input, shape index: {}]
  %s4 = inlined_call_operand.vmem [shape: f32[1,512], index: 4, kind: input, shape index: {}]
  %s5 = inlined_call_operand.vmem [shape: bf16[512,256], index: 5, kind: input, shape index: {}]
  %s6 = inlined_call_operand.vmem [shape: f32[1,256], index: 6, kind: input, shape index: {}]
  %s7 = inlined_call_operand.hbm [shape: f32[8,256], index: 7, kind: output, shape index: {}]
  %s8 = sld [smem:[#allocation0]]
  $region38: #{generator_forward.1} parent=0
    _
  %s10 = ssub.s32 1, %s8
  %s11 = scalar_select 0, %s10, %s8
  $region1: #{generator_forward.1} parent=0
    #allocation2 [shape = 'u8[8192]{0}', space=vmem, size = 0x2000, scoped, tag = 'output window, operand 0, single buffered']
    #allocation3 [shape = 's32[1]{0}', space=sflag, size = 0x4, scoped, tag = 'scoped memory for generator_forward.1']
    %12 = vsyncpa [#allocation3], 0
    // Predicated region
    $region2: #{generator_forward.1} parent=1 // pred_check
      _
    $region3: #{generator_forward.1} parent=1 // pred_check_branch
      %14 = sbr.rel (0) target = $region5
    $region4: #{generator_forward.1} parent=1 // pred_region
      _
    $region5: #{generator_forward.1} parent=1 // pred_fallthru
      _
    // Predicated region
    $region6: #{generator_forward.1} parent=1 // pred_check
      _
    $region7: #{generator_forward.1} parent=1 // pred_check_branch
      %16 = sbr.rel (0) target = $region9
    $region8: #{generator_forward.1} parent=1 // pred_region
      _
    $region9: #{generator_forward.1} parent=1 // pred_fallthru
      _
    // Predicated region
    $region10: #{generator_forward.1} parent=1 // pred_check
      _
    $region11: #{generator_forward.1} parent=1 // pred_check_branch
      %18 = sbr.rel (0) target = $region13
    $region12: #{generator_forward.1} parent=1 // pred_region
      _
    $region13: #{generator_forward.1} parent=1 // pred_fallthru
      _
    // Predicated region
    $region14: #{generator_forward.1} parent=1 // pred_check
      _
    $region15: #{generator_forward.1} parent=1 // pred_check_branch
      %20 = sbr.rel (0) target = $region17
    $region16: #{generator_forward.1} parent=1 // pred_region
      _
    $region17: #{generator_forward.1} parent=1 // pred_fallthru
      _
    // Predicated region
    $region18: #{generator_forward.1} parent=1 // pred_check
      _
    $region19: #{generator_forward.1} parent=1 // pred_check_branch
      %22 = sbr.rel (0) target = $region21
    $region20: #{generator_forward.1} parent=1 // pred_region
      _
    $region21: #{generator_forward.1} parent=1 // pred_fallthru
      _
    // Predicated region
    $region22: #{generator_forward.1} parent=1 // pred_check
      _
    $region23: #{generator_forward.1} parent=1 // pred_check_branch
      %24 = sbr.rel (0) target = $region25
    $region24: #{generator_forward.1} parent=1 // pred_region
      _
    $region25: #{generator_forward.1} parent=1 // pred_fallthru
      _
    // Predicated region
    $region26: #{generator_forward.1} parent=1 // pred_check
      _
    $region27: #{generator_forward.1} parent=1 // pred_check_branch
      %26 = sbr.rel (0) target = $region29
    $region28: #{generator_forward.1} parent=1 // pred_region
      _
    $region29: #{generator_forward.1} parent=1 // pred_fallthru
      _
    %v28 = vld [vmem:[%s0] sm:$0xf]
    %v29 = vld [vmem:[%s1] sm:$0xff]
    %v30 = vld [vmem:[%s1 + $0x8] sm:$0xff]
    %v31 = vld [vmem:[%s1 + $0x10] sm:$0xff]
    %v32 = vld [vmem:[%s1 + $0x18] sm:$0xff]
    %v33 = vld [vmem:[%s1 + $0x20] sm:$0xff]
    %v34 = vld [vmem:[%s1 + $0x28] sm:$0xff]
    %v35 = vld [vmem:[%s1 + $0x30] sm:$0xff]
    %v36 = vld [vmem:[%s1 + $0x38] sm:$0xff]
    %v37 = vld [vmem:[%s1 + $0x40] sm:$0xff]
    %v38 = vld [vmem:[%s1 + $0x48] sm:$0xff]
    %v39 = vld [vmem:[%s1 + $0x50] sm:$0xff]
    %v40 = vld [vmem:[%s1 + $0x58] sm:$0xff]
    %v41 = vld [vmem:[%s1 + $0x60] sm:$0xff]
    %v42 = vld [vmem:[%s1 + $0x68] sm:$0xff]
    %v43 = vld [vmem:[%s1 + $0x70] sm:$0xff]
    %v44 = vld [vmem:[%s1 + $0x78] sm:$0xff]
    %v45 = vld [vmem:[%s2] sm:$0x3]
    %v47 = vlaneseq
    %v48 = vshrl.u32 %v47, 7
    %v49 = vsub.s32 0, %v48
    %v50 = vrot.slane %v45, %v49
    %v51 = vlaneseq
    %v52 = vshrl.u32 %v51, 7
    %v53 = vsub.s32 1, %v52
    %v54 = vrot.slane %v45, %v53
    %v73 = vunpack.c.l.b16 %v29
    %v74 = vunpack.c.h.b16 %v29
    %v75 = vunpack.c.l.b16 %v30
    %v76 = vunpack.c.h.b16 %v30
    %v77 = vunpack.c.l.b16 %v31
    %v78 = vunpack.c.h.b16 %v31
    %v79 = vunpack.c.l.b16 %v32
    %v80 = vunpack.c.h.b16 %v32
    %v81 = vunpack.c.l.b16 %v33
    %v82 = vunpack.c.h.b16 %v33
    %v83 = vunpack.c.l.b16 %v34
    %v84 = vunpack.c.h.b16 %v34
    %v85 = vunpack.c.l.b16 %v35
    %v86 = vunpack.c.h.b16 %v35
    %v87 = vunpack.c.l.b16 %v36
    %v88 = vunpack.c.h.b16 %v36
    %v89 = vunpack.c.l.b16 %v37
    %v90 = vunpack.c.h.b16 %v37
    %v91 = vunpack.c.l.b16 %v38
    %v92 = vunpack.c.h.b16 %v38
    %v93 = vunpack.c.l.b16 %v39
    %v94 = vunpack.c.h.b16 %v39
    %v95 = vunpack.c.l.b16 %v40
    %v96 = vunpack.c.h.b16 %v40
    %v97 = vunpack.c.l.b16 %v41
    %v98 = vunpack.c.h.b16 %v41
    %v99 = vunpack.c.l.b16 %v42
    %v100 = vunpack.c.h.b16 %v42
    %v101 = vunpack.c.l.b16 %v43
    %v102 = vunpack.c.h.b16 %v43
    %v103 = vunpack.c.l.b16 %v44
    %v104 = vunpack.c.h.b16 %v44
    %v105 = vpack.c.b16 %v75, %v73
    %v106 = vpack.c.b16 %v76, %v74
    %v107 = vpack.c.b16 %v79, %v77
    %v108 = vpack.c.b16 %v80, %v78
    %v109 = vpack.c.b16 %v83, %v81
    %v110 = vpack.c.b16 %v84, %v82
    %v111 = vpack.c.b16 %v87, %v85
    %v112 = vpack.c.b16 %v88, %v86
    %v113 = vpack.c.b16 %v91, %v89
    %v114 = vpack.c.b16 %v92, %v90
    %v115 = vpack.c.b16 %v95, %v93
    %v116 = vpack.c.b16 %v96, %v94
    %v117 = vpack.c.b16 %v99, %v97
    %v118 = vpack.c.b16 %v100, %v98
    %v119 = vpack.c.b16 %v103, %v101
    %v120 = vpack.c.b16 %v104, %v102
    %137 = vmatprep.subr.bf16.mxu0 %v120
    %138 = vmatpush1.bf16.msra.mxu0 %v119
    %139 = vmatprep.subr.bf16.mxu0 %v118
    %140 = vmatpush1.bf16.msra.mxu0 %v117
    %141 = vmatprep.subr.bf16.mxu0 %v116
    %142 = vmatpush1.bf16.msra.mxu0 %v115
    %143 = vmatprep.subr.bf16.mxu0 %v114
    %144 = vmatpush1.bf16.msra.mxu0 %v113
    %145 = vmatprep.subr.bf16.mxu0 %v112
    %146 = vmatpush1.bf16.msra.mxu0 %v111
    %147 = vmatprep.subr.bf16.mxu0 %v110
    %148 = vmatpush1.bf16.msra.mxu0 %v109
    %149 = vmatprep.subr.bf16.mxu0 %v108
    %150 = vmatpush1.bf16.msra.mxu0 %v107
    %151 = vmatprep.subr.bf16.mxu0 %v106
    %152 = vmatpush1.bf16.msra.mxu0 %v105
    %153 = vmatprep.subr.bf16.mxu0 0
    %154 = vmatpush2.bf16.msra.mxu0 0
    %155 = vmatprep.subr.bf16.mxu0 0
    %156 = vmatpush2.bf16.msra.mxu0 0
    %157 = vmatprep.subr.bf16.mxu0 0
    %158 = vmatpush2.bf16.msra.mxu0 0
    %159 = vmatprep.subr.bf16.mxu0 0
    %160 = vmatpush2.bf16.msra.mxu0 0
    %161 = vmatprep.subr.bf16.mxu0 0
    %162 = vmatpush2.bf16.msra.mxu0 0
    %163 = vmatprep.subr.bf16.mxu0 0
    %164 = vmatpush2.bf16.msra.mxu0 0
    %165 = vmatprep.subr.bf16.mxu0 0
    %166 = vmatpush2.bf16.msra.mxu0 0
    %167 = vmatprep.subr.bf16.mxu0 0
    %168 = vmatpush2.bf16.msra.mxu0 0
    %169 = vmatprep.mubr.bf16.mxu0 0
    %170 = vmatmul.mubr.bf16.gmra.mxu0 %v28
    %v171 = vpop.f32.mrf.mxu0
    %v172 = vadd.f32 %v50, %v171
    %v173 = vpop.f32.mrf.mxu0
    %v174 = vadd.f32 %v54, %v173
    %v175 = vpop.f32.mrf.mxu0
    %v176 = vpop.f32.mrf.mxu0
    %177 = vdwg.mxu0
    %v178 = vmax.f32 %v172, 0.0
    %v179 = vmax.f32 %v174, 0.0
    %v180 = vpack.c.bf16 %v178, %v178
    %v181 = vpack.c.bf16 %v179, %v179
    %v182 = vld [vmem:[%s3] sm:$0xff]
    %v183 = vld [vmem:[%s3 + $0x8] sm:$0xff]
    %v184 = vld [vmem:[%s3 + $0x10] sm:$0xff]
    %v185 = vld [vmem:[%s3 + $0x18] sm:$0xff]
    %v186 = vld [vmem:[%s3 + $0x20] sm:$0xff]
    %v187 = vld [vmem:[%s3 + $0x28] sm:$0xff]
    %v188 = vld [vmem:[%s3 + $0x30] sm:$0xff]
    %v189 = vld [vmem:[%s3 + $0x38] sm:$0xff]
    %v190 = vld [vmem:[%s3 + $0x40] sm:$0xff]
    %v191 = vld [vmem:[%s3 + $0x48] sm:$0xff]
    %v192 = vld [vmem:[%s3 + $0x50] sm:$0xff]
    %v193 = vld [vmem:[%s3 + $0x58] sm:$0xff]
    %v194 = vld [vmem:[%s3 + $0x60] sm:$0xff]
    %v195 = vld [vmem:[%s3 + $0x68] sm:$0xff]
    %v196 = vld [vmem:[%s3 + $0x70] sm:$0xff]
    %v197 = vld [vmem:[%s3 + $0x78] sm:$0xff]
    %v198 = vld [vmem:[%s3 + $0x80] sm:$0xff]
    %v199 = vld [vmem:[%s3 + $0x88] sm:$0xff]
    %v200 = vld [vmem:[%s3 + $0x90] sm:$0xff]
    %v201 = vld [vmem:[%s3 + $0x98] sm:$0xff]
    %v202 = vld [vmem:[%s3 + $0xa0] sm:$0xff]
    %v203 = vld [vmem:[%s3 + $0xa8] sm:$0xff]
    %v204 = vld [vmem:[%s3 + $0xb0] sm:$0xff]
    %v205 = vld [vmem:[%s3 + $0xb8] sm:$0xff]
    %v206 = vld [vmem:[%s3 + $0xc0] sm:$0xff]
    %v207 = vld [vmem:[%s3 + $0xc8] sm:$0xff]
    %v208 = vld [vmem:[%s3 + $0xd0] sm:$0xff]
    %v209 = vld [vmem:[%s3 + $0xd8] sm:$0xff]
    %v210 = vld [vmem:[%s3 + $0xe0] sm:$0xff]
    %v211 = vld [vmem:[%s3 + $0xe8] sm:$0xff]
    %v212 = vld [vmem:[%s3 + $0xf0] sm:$0xff]
    %v213 = vld [vmem:[%s3 + $0xf8] sm:$0xff]
    %v214 = vld [vmem:[%s3 + $0x100] sm:$0xff]
    %v215 = vld [vmem:[%s3 + $0x108] sm:$0xff]
    %v216 = vld [vmem:[%s3 + $0x110] sm:$0xff]
    %v217 = vld [vmem:[%s3 + $0x118] sm:$0xff]
    %v218 = vld [vmem:[%s3 + $0x120] sm:$0xff]
    %v219 = vld [vmem:[%s3 + $0x128] sm:$0xff]
    %v220 = vld [vmem:[%s3 + $0x130] sm:$0xff]
    %v221 = vld [vmem:[%s3 + $0x138] sm:$0xff]
    %v222 = vld [vmem:[%s3 + $0x140] sm:$0xff]
    %v223 = vld [vmem:[%s3 + $0x148] sm:$0xff]
    %v224 = vld [vmem:[%s3 + $0x150] sm:$0xff]
    %v225 = vld [vmem:[%s3 + $0x158] sm:$0xff]
    %v226 = vld [vmem:[%s3 + $0x160] sm:$0xff]
    %v227 = vld [vmem:[%s3 + $0x168] sm:$0xff]
    %v228 = vld [vmem:[%s3 + $0x170] sm:$0xff]
    %v229 = vld [vmem:[%s3 + $0x178] sm:$0xff]
    %v230 = vld [vmem:[%s3 + $0x180] sm:$0xff]
    %v231 = vld [vmem:[%s3 + $0x188] sm:$0xff]
    %v232 = vld [vmem:[%s3 + $0x190] sm:$0xff]
    %v233 = vld [vmem:[%s3 + $0x198] sm:$0xff]
    %v234 = vld [vmem:[%s3 + $0x1a0] sm:$0xff]
    %v235 = vld [vmem:[%s3 + $0x1a8] sm:$0xff]
    %v236 = vld [vmem:[%s3 + $0x1b0] sm:$0xff]
    %v237 = vld [vmem:[%s3 + $0x1b8] sm:$0xff]
    %v238 = vld [vmem:[%s3 + $0x1c0] sm:$0xff]
    %v239 = vld [vmem:[%s3 + $0x1c8] sm:$0xff]
    %v240 = vld [vmem:[%s3 + $0x1d0] sm:$0xff]
    %v241 = vld [vmem:[%s3 + $0x1d8] sm:$0xff]
    %v242 = vld [vmem:[%s3 + $0x1e0] sm:$0xff]
    %v243 = vld [vmem:[%s3 + $0x1e8] sm:$0xff]
    %v244 = vld [vmem:[%s3 + $0x1f0] sm:$0xff]
    %v245 = vld [vmem:[%s3 + $0x1f8] sm:$0xff]
    %v246 = vld [vmem:[%s4] sm:$0xf]
    %v248 = vlaneseq
    %v249 = vshrl.u32 %v248, 7
    %v250 = vsub.s32 0, %v249
    %v251 = vrot.slane %v246, %v250
    %v252 = vlaneseq
    %v253 = vshrl.u32 %v252, 7
    %v254 = vsub.s32 1, %v253
    %v255 = vrot.slane %v246, %v254
    %v256 = vlaneseq
    %v257 = vshrl.u32 %v256, 7
    %v258 = vsub.s32 2, %v257
    %v259 = vrot.slane %v246, %v258
    %v260 = vlaneseq
    %v261 = vshrl.u32 %v260, 7
    %v262 = vsub.s32 3, %v261
    %v263 = vrot.slane %v246, %v262
    %v332 = vunpack.c.l.b16 %v182
    %v333 = vunpack.c.h.b16 %v182
    %v334 = vunpack.c.l.b16 %v183
    %v335 = vunpack.c.h.b16 %v183
    %v336 = vunpack.c.l.b16 %v184
    %v337 = vunpack.c.h.b16 %v184
    %v338 = vunpack.c.l.b16 %v185
    %v339 = vunpack.c.h.b16 %v185
    %v340 = vunpack.c.l.b16 %v186
    %v341 = vunpack.c.h.b16 %v186
    %v342 = vunpack.c.l.b16 %v187
    %v343 = vunpack.c.h.b16 %v187
    %v344 = vunpack.c.l.b16 %v188
    %v345 = vunpack.c.h.b16 %v188
    %v346 = vunpack.c.l.b16 %v189
    %v347 = vunpack.c.h.b16 %v189
    %v348 = vunpack.c.l.b16 %v190
    %v349 = vunpack.c.h.b16 %v190
    %v350 = vunpack.c.l.b16 %v191
    %v351 = vunpack.c.h.b16 %v191
    %v352 = vunpack.c.l.b16 %v192
    %v353 = vunpack.c.h.b16 %v192
    %v354 = vunpack.c.l.b16 %v193
    %v355 = vunpack.c.h.b16 %v193
    %v356 = vunpack.c.l.b16 %v194
    %v357 = vunpack.c.h.b16 %v194
    %v358 = vunpack.c.l.b16 %v195
    %v359 = vunpack.c.h.b16 %v195
    %v360 = vunpack.c.l.b16 %v196
    %v361 = vunpack.c.h.b16 %v196
    %v362 = vunpack.c.l.b16 %v197
    %v363 = vunpack.c.h.b16 %v197
    %v364 = vunpack.c.l.b16 %v198
    %v365 = vunpack.c.h.b16 %v198
    %v366 = vunpack.c.l.b16 %v199
    %v367 = vunpack.c.h.b16 %v199
    %v368 = vunpack.c.l.b16 %v200
    %v369 = vunpack.c.h.b16 %v200
    %v370 = vunpack.c.l.b16 %v201
    %v371 = vunpack.c.h.b16 %v201
    %v372 = vunpack.c.l.b16 %v202
    %v373 = vunpack.c.h.b16 %v202
    %v374 = vunpack.c.l.b16 %v203
    %v375 = vunpack.c.h.b16 %v203
    %v376 = vunpack.c.l.b16 %v204
    %v377 = vunpack.c.h.b16 %v204
    %v378 = vunpack.c.l.b16 %v205
    %v379 = vunpack.c.h.b16 %v205
    %v380 = vunpack.c.l.b16 %v206
    %v381 = vunpack.c.h.b16 %v206
    %v382 = vunpack.c.l.b16 %v207
    %v383 = vunpack.c.h.b16 %v207
    %v384 = vunpack.c.l.b16 %v208
    %v385 = vunpack.c.h.b16 %v208
    %v386 = vunpack.c.l.b16 %v209
    %v387 = vunpack.c.h.b16 %v209
    %v388 = vunpack.c.l.b16 %v210
    %v389 = vunpack.c.h.b16 %v210
    %v390 = vunpack.c.l.b16 %v211
    %v391 = vunpack.c.h.b16 %v211
    %v392 = vunpack.c.l.b16 %v212
    %v393 = vunpack.c.h.b16 %v212
    %v394 = vunpack.c.l.b16 %v213
    %v395 = vunpack.c.h.b16 %v213
    %v396 = vunpack.c.l.b16 %v214
    %v397 = vunpack.c.h.b16 %v214
    %v398 = vunpack.c.l.b16 %v215
    %v399 = vunpack.c.h.b16 %v215
    %v400 = vunpack.c.l.b16 %v216
    %v401 = vunpack.c.h.b16 %v216
    %v402 = vunpack.c.l.b16 %v217
    %v403 = vunpack.c.h.b16 %v217
    %v404 = vunpack.c.l.b16 %v218
    %v405 = vunpack.c.h.b16 %v218
    %v406 = vunpack.c.l.b16 %v219
    %v407 = vunpack.c.h.b16 %v219
    %v408 = vunpack.c.l.b16 %v220
    %v409 = vunpack.c.h.b16 %v220
    %v410 = vunpack.c.l.b16 %v221
    %v411 = vunpack.c.h.b16 %v221
    %v412 = vunpack.c.l.b16 %v222
    %v413 = vunpack.c.h.b16 %v222
    %v414 = vunpack.c.l.b16 %v223
    %v415 = vunpack.c.h.b16 %v223
    %v416 = vunpack.c.l.b16 %v224
    %v417 = vunpack.c.h.b16 %v224
    %v418 = vunpack.c.l.b16 %v225
    %v419 = vunpack.c.h.b16 %v225
    %v420 = vunpack.c.l.b16 %v226
    %v421 = vunpack.c.h.b16 %v226
    %v422 = vunpack.c.l.b16 %v227
    %v423 = vunpack.c.h.b16 %v227
    %v424 = vunpack.c.l.b16 %v228
    %v425 = vunpack.c.h.b16 %v228
    %v426 = vunpack.c.l.b16 %v229
    %v427 = vunpack.c.h.b16 %v229
    %v428 = vunpack.c.l.b16 %v230
    %v429 = vunpack.c.h.b16 %v230
    %v430 = vunpack.c.l.b16 %v231
    %v431 = vunpack.c.h.b16 %v231
    %v432 = vunpack.c.l.b16 %v232
    %v433 = vunpack.c.h.b16 %v232
    %v434 = vunpack.c.l.b16 %v233
    %v435 = vunpack.c.h.b16 %v233
    %v436 = vunpack.c.l.b16 %v234
    %v437 = vunpack.c.h.b16 %v234
    %v438 = vunpack.c.l.b16 %v235
    %v439 = vunpack.c.h.b16 %v235
    %v440 = vunpack.c.l.b16 %v236
    %v441 = vunpack.c.h.b16 %v236
    %v442 = vunpack.c.l.b16 %v237
    %v443 = vunpack.c.h.b16 %v237
    %v444 = vunpack.c.l.b16 %v238
    %v445 = vunpack.c.h.b16 %v238
    %v446 = vunpack.c.l.b16 %v239
    %v447 = vunpack.c.h.b16 %v239
    %v448 = vunpack.c.l.b16 %v240
    %v449 = vunpack.c.h.b16 %v240
    %v450 = vunpack.c.l.b16 %v241
    %v451 = vunpack.c.h.b16 %v241
    %v452 = vunpack.c.l.b16 %v242
    %v453 = vunpack.c.h.b16 %v242
    %v454 = vunpack.c.l.b16 %v243
    %v455 = vunpack.c.h.b16 %v243
    %v456 = vunpack.c.l.b16 %v244
    %v457 = vunpack.c.h.b16 %v244
    %v458 = vunpack.c.l.b16 %v245
    %v459 = vunpack.c.h.b16 %v245
    %v460 = vpack.c.b16 %v336, %v332
    %v461 = vpack.c.b16 %v337, %v333
    %v462 = vpack.c.b16 %v338, %v334
    %v463 = vpack.c.b16 %v339, %v335
    %v464 = vpack.c.b16 %v344, %v340
    %v465 = vpack.c.b16 %v345, %v341
    %v466 = vpack.c.b16 %v346, %v342
    %v467 = vpack.c.b16 %v347, %v343
    %v468 = vpack.c.b16 %v352, %v348
    %v469 = vpack.c.b16 %v353, %v349
    %v470 = vpack.c.b16 %v354, %v350
    %v471 = vpack.c.b16 %v355, %v351
    %v472 = vpack.c.b16 %v360, %v356
    %v473 = vpack.c.b16 %v361, %v357
    %v474 = vpack.c.b16 %v362, %v358
    %v475 = vpack.c.b16 %v363, %v359
    %v476 = vpack.c.b16 %v368, %v364
    %v477 = vpack.c.b16 %v369, %v365
    %v478 = vpack.c.b16 %v370, %v366
    %v479 = vpack.c.b16 %v371, %v367
    %v480 = vpack.c.b16 %v376, %v372
    %v481 = vpack.c.b16 %v377, %v373
    %v482 = vpack.c.b16 %v378, %v374
    %v483 = vpack.c.b16 %v379, %v375
    %v484 = vpack.c.b16 %v384, %v380
    %v485 = vpack.c.b16 %v385, %v381
    %v486 = vpack.c.b16 %v386, %v382
    %v487 = vpack.c.b16 %v387, %v383
    %v488 = vpack.c.b16 %v392, %v388
    %v489 = vpack.c.b16 %v393, %v389
    %v490 = vpack.c.b16 %v394, %v390
    %v491 = vpack.c.b16 %v395, %v391
    %v492 = vpack.c.b16 %v400, %v396
    %v493 = vpack.c.b16 %v401, %v397
    %v494 = vpack.c.b16 %v402, %v398
    %v495 = vpack.c.b16 %v403, %v399
    %v496 = vpack.c.b16 %v408, %v404
    %v497 = vpack.c.b16 %v409, %v405
    %v498 = vpack.c.b16 %v410, %v406
    %v499 = vpack.c.b16 %v411, %v407
    %v500 = vpack.c.b16 %v416, %v412
    %v501 = vpack.c.b16 %v417, %v413
    %v502 = vpack.c.b16 %v418, %v414
    %v503 = vpack.c.b16 %v419, %v415
    %v504 = vpack.c.b16 %v424, %v420
    %v505 = vpack.c.b16 %v425, %v421
    %v506 = vpack.c.b16 %v426, %v422
    %v507 = vpack.c.b16 %v427, %v423
    %v508 = vpack.c.b16 %v432, %v428
    %v509 = vpack.c.b16 %v433, %v429
    %v510 = vpack.c.b16 %v434, %v430
    %v511 = vpack.c.b16 %v435, %v431
    %v512 = vpack.c.b16 %v440, %v436
    %v513 = vpack.c.b16 %v441, %v437
    %v514 = vpack.c.b16 %v442, %v438
    %v515 = vpack.c.b16 %v443, %v439
    %v516 = vpack.c.b16 %v448, %v444
    %v517 = vpack.c.b16 %v449, %v445
    %v518 = vpack.c.b16 %v450, %v446
    %v519 = vpack.c.b16 %v451, %v447
    %v520 = vpack.c.b16 %v456, %v452
    %v521 = vpack.c.b16 %v457, %v453
    %v522 = vpack.c.b16 %v458, %v454
    %v523 = vpack.c.b16 %v459, %v455
    %588 = vmatprep.subr.bf16.mxu0 %v489
    %589 = vmatpush1.bf16.msra.mxu0 %v488
    %590 = vmatprep.subr.bf16.mxu0 %v485
    %591 = vmatpush1.bf16.msra.mxu0 %v484
    %592 = vmatprep.subr.bf16.mxu0 %v481
    %593 = vmatpush1.bf16.msra.mxu0 %v480
    %594 = vmatprep.subr.bf16.mxu0 %v477
    %595 = vmatpush1.bf16.msra.mxu0 %v476
    %596 = vmatprep.subr.bf16.mxu0 %v473
    %597 = vmatpush1.bf16.msra.mxu0 %v472
    %598 = vmatprep.subr.bf16.mxu0 %v469
    %599 = vmatpush1.bf16.msra.mxu0 %v468
    %600 = vmatprep.subr.bf16.mxu0 %v465
    %601 = vmatpush1.bf16.msra.mxu0 %v464
    %602 = vmatprep.subr.bf16.mxu0 %v461
    %603 = vmatpush1.bf16.msra.mxu0 %v460
    %604 = vmatprep.subr.bf16.mxu0 %v521
    %605 = vmatpush2.bf16.msra.mxu0 %v520
    %606 = vmatprep.subr.bf16.mxu0 %v517
    %607 = vmatpush2.bf16.msra.mxu0 %v516
    %608 = vmatprep.subr.bf16.mxu0 %v513
    %609 = vmatpush2.bf16.msra.mxu0 %v512
    %610 = vmatprep.subr.bf16.mxu0 %v509
    %611 = vmatpush2.bf16.msra.mxu0 %v508
    %612 = vmatprep.subr.bf16.mxu0 %v505
    %613 = vmatpush2.bf16.msra.mxu0 %v504
    %614 = vmatprep.subr.bf16.mxu0 %v501
    %615 = vmatpush2.bf16.msra.mxu0 %v500
    %616 = vmatprep.subr.bf16.mxu0 %v497
    %617 = vmatpush2.bf16.msra.mxu0 %v496
    %618 = vmatprep.subr.bf16.mxu0 %v493
    %619 = vmatpush2.bf16.msra.mxu0 %v492
    %620 = vmatprep.mubr.bf16.mxu0 %v181
    %621 = vmatmul.mubr.bf16.gmra.mxu0 %v180
    %v622 = vpop.f32.mrf.mxu0
    %v623 = vadd.f32 %v251, %v622
    %v624 = vpop.f32.mrf.mxu0
    %v625 = vadd.f32 %v255, %v624
    %v626 = vpop.f32.mrf.mxu0
    %v627 = vpop.f32.mrf.mxu0
    %628 = vdwg.mxu0
    %629 = vmatprep.subr.bf16.mxu0 %v491
    %630 = vmatpush1.bf16.msra.mxu0 %v490
    %631 = vmatprep.subr.bf16.mxu0 %v487
    %632 = vmatpush1.bf16.msra.mxu0 %v486
    %633 = vmatprep.subr.bf16.mxu0 %v483
    %634 = vmatpush1.bf16.msra.mxu0 %v482
    %635 = vmatprep.subr.bf16.mxu0 %v479
    %636 = vmatpush1.bf16.msra.mxu0 %v478
    %637 = vmatprep.subr.bf16.mxu0 %v475
    %638 = vmatpush1.bf16.msra.mxu0 %v474
    %639 = vmatprep.subr.bf16.mxu0 %v471
    %640 = vmatpush1.bf16.msra.mxu0 %v470
    %641 = vmatprep.subr.bf16.mxu0 %v467
    %642 = vmatpush1.bf16.msra.mxu0 %v466
    %643 = vmatprep.subr.bf16.mxu0 %v463
    %644 = vmatpush1.bf16.msra.mxu0 %v462
    %645 = vmatprep.subr.bf16.mxu0 %v523
    %646 = vmatpush2.bf16.msra.mxu0 %v522
    %647 = vmatprep.subr.bf16.mxu0 %v519
    %648 = vmatpush2.bf16.msra.mxu0 %v518
    %649 = vmatprep.subr.bf16.mxu0 %v515
    %650 = vmatpush2.bf16.msra.mxu0 %v514
    %651 = vmatprep.subr.bf16.mxu0 %v511
    %652 = vmatpush2.bf16.msra.mxu0 %v510
    %653 = vmatprep.subr.bf16.mxu0 %v507
    %654 = vmatpush2.bf16.msra.mxu0 %v506
    %655 = vmatprep.subr.bf16.mxu0 %v503
    %656 = vmatpush2.bf16.msra.mxu0 %v502
    %657 = vmatprep.subr.bf16.mxu0 %v499
    %658 = vmatpush2.bf16.msra.mxu0 %v498
    %659 = vmatprep.subr.bf16.mxu0 %v495
    %660 = vmatpush2.bf16.msra.mxu0 %v494
    %661 = vmatprep.mubr.bf16.mxu0 %v181
    %662 = vmatmul.mubr.bf16.gmra.mxu0 %v180
    %v663 = vpop.f32.mrf.mxu0
    %v664 = vadd.f32 %v259, %v663
    %v665 = vpop.f32.mrf.mxu0
    %v666 = vadd.f32 %v263, %v665
    %v667 = vpop.f32.mrf.mxu0
    %v668 = vpop.f32.mrf.mxu0
    %669 = vdwg.mxu0
    %v670 = vmax.f32 %v623, 0.0
    %v671 = vmax.f32 %v625, 0.0
    %v672 = vmax.f32 %v664, 0.0
    %v673 = vmax.f32 %v666, 0.0
    %v674 = vpack.c.bf16 %v670, %v670
    %v675 = vpack.c.bf16 %v671, %v671
    %v676 = vpack.c.bf16 %v672, %v672
    %v677 = vpack.c.bf16 %v673, %v673
    %v678 = vld [vmem:[%s5] sm:$0xff]
    %v679 = vld [vmem:[%s5 + $0x8] sm:$0xff]
    %v680 = vld [vmem:[%s5 + $0x10] sm:$0xff]
    %v681 = vld [vmem:[%s5 + $0x18] sm:$0xff]
    %v682 = vld [vmem:[%s5 + $0x20] sm:$0xff]
    %v683 = vld [vmem:[%s5 + $0x28] sm:$0xff]
    %v684 = vld [vmem:[%s5 + $0x30] sm:$0xff]
    %v685 = vld [vmem:[%s5 + $0x38] sm:$0xff]
    %v686 = vld [vmem:[%s5 + $0x40] sm:$0xff]
    %v687 = vld [vmem:[%s5 + $0x48] sm:$0xff]
    %v688 = vld [vmem:[%s5 + $0x50] sm:$0xff]
    %v689 = vld [vmem:[%s5 + $0x58] sm:$0xff]
    %v690 = vld [vmem:[%s5 + $0x60] sm:$0xff]
    %v691 = vld [vmem:[%s5 + $0x68] sm:$0xff]
    %v692 = vld [vmem:[%s5 + $0x70] sm:$0xff]
    %v693 = vld [vmem:[%s5 + $0x78] sm:$0xff]
    %v694 = vld [vmem:[%s5 + $0x80] sm:$0xff]
    %v695 = vld [vmem:[%s5 + $0x88] sm:$0xff]
    %v696 = vld [vmem:[%s5 + $0x90] sm:$0xff]
    %v697 = vld [vmem:[%s5 + $0x98] sm:$0xff]
    %v698 = vld [vmem:[%s5 + $0xa0] sm:$0xff]
    %v699 = vld [vmem:[%s5 + $0xa8] sm:$0xff]
    %v700 = vld [vmem:[%s5 + $0xb0] sm:$0xff]
    %v701 = vld [vmem:[%s5 + $0xb8] sm:$0xff]
    %v702 = vld [vmem:[%s5 + $0xc0] sm:$0xff]
    %v703 = vld [vmem:[%s5 + $0xc8] sm:$0xff]
    %v704 = vld [vmem:[%s5 + $0xd0] sm:$0xff]
    %v705 = vld [vmem:[%s5 + $0xd8] sm:$0xff]
    %v706 = vld [vmem:[%s5 + $0xe0] sm:$0xff]
    %v707 = vld [vmem:[%s5 + $0xe8] sm:$0xff]
    %v708 = vld [vmem:[%s5 + $0xf0] sm:$0xff]
    %v709 = vld [vmem:[%s5 + $0xf8] sm:$0xff]
    %v710 = vld [vmem:[%s5 + $0x100] sm:$0xff]
    %v711 = vld [vmem:[%s5 + $0x108] sm:$0xff]
    %v712 = vld [vmem:[%s5 + $0x110] sm:$0xff]
    %v713 = vld [vmem:[%s5 + $0x118] sm:$0xff]
    %v714 = vld [vmem:[%s5 + $0x120] sm:$0xff]
    %v715 = vld [vmem:[%s5 + $0x128] sm:$0xff]
    %v716 = vld [vmem:[%s5 + $0x130] sm:$0xff]
    %v717 = vld [vmem:[%s5 + $0x138] sm:$0xff]
    %v718 = vld [vmem:[%s5 + $0x140] sm:$0xff]
    %v719 = vld [vmem:[%s5 + $0x148] sm:$0xff]
    %v720 = vld [vmem:[%s5 + $0x150] sm:$0xff]
    %v721 = vld [vmem:[%s5 + $0x158] sm:$0xff]
    %v722 = vld [vmem:[%s5 + $0x160] sm:$0xff]
    %v723 = vld [vmem:[%s5 + $0x168] sm:$0xff]
    %v724 = vld [vmem:[%s5 + $0x170] sm:$0xff]
    %v725 = vld [vmem:[%s5 + $0x178] sm:$0xff]
    %v726 = vld [vmem:[%s5 + $0x180] sm:$0xff]
    %v727 = vld [vmem:[%s5 + $0x188] sm:$0xff]
    %v728 = vld [vmem:[%s5 + $0x190] sm:$0xff]
    %v729 = vld [vmem:[%s5 + $0x198] sm:$0xff]
    %v730 = vld [vmem:[%s5 + $0x1a0] sm:$0xff]
    %v731 = vld [vmem:[%s5 + $0x1a8] sm:$0xff]
    %v732 = vld [vmem:[%s5 + $0x1b0] sm:$0xff]
    %v733 = vld [vmem:[%s5 + $0x1b8] sm:$0xff]
    %v734 = vld [vmem:[%s5 + $0x1c0] sm:$0xff]
    %v735 = vld [vmem:[%s5 + $0x1c8] sm:$0xff]
    %v736 = vld [vmem:[%s5 + $0x1d0] sm:$0xff]
    %v737 = vld [vmem:[%s5 + $0x1d8] sm:$0xff]
    %v738 = vld [vmem:[%s5 + $0x1e0] sm:$0xff]
    %v739 = vld [vmem:[%s5 + $0x1e8] sm:$0xff]
    %v740 = vld [vmem:[%s5 + $0x1f0] sm:$0xff]
    %v741 = vld [vmem:[%s5 + $0x1f8] sm:$0xff]
    %v742 = vld [vmem:[%s6] sm:$0x3]
    %v744 = vlaneseq
    %v745 = vshrl.u32 %v744, 7
    %v746 = vsub.s32 0, %v745
    %v747 = vrot.slane %v742, %v746
    %v748 = vlaneseq
    %v749 = vshrl.u32 %v748, 7
    %v750 = vsub.s32 1, %v749
    %v751 = vrot.slane %v742, %v750
    %v818 = vunpack.c.l.b16 %v678
    %v819 = vunpack.c.h.b16 %v678
    %v820 = vunpack.c.l.b16 %v679
    %v821 = vunpack.c.h.b16 %v679
    %v822 = vunpack.c.l.b16 %v680
    %v823 = vunpack.c.h.b16 %v680
    %v824 = vunpack.c.l.b16 %v681
    %v825 = vunpack.c.h.b16 %v681
    %v826 = vunpack.c.l.b16 %v682
    %v827 = vunpack.c.h.b16 %v682
    %v828 = vunpack.c.l.b16 %v683
    %v829 = vunpack.c.h.b16 %v683
    %v830 = vunpack.c.l.b16 %v684
    %v831 = vunpack.c.h.b16 %v684
    %v832 = vunpack.c.l.b16 %v685
    %v833 = vunpack.c.h.b16 %v685
    %v834 = vunpack.c.l.b16 %v686
    %v835 = vunpack.c.h.b16 %v686
    %v836 = vunpack.c.l.b16 %v687
    %v837 = vunpack.c.h.b16 %v687
    %v838 = vunpack.c.l.b16 %v688
    %v839 = vunpack.c.h.b16 %v688
    %v840 = vunpack.c.l.b16 %v689
    %v841 = vunpack.c.h.b16 %v689
    %v842 = vunpack.c.l.b16 %v690
    %v843 = vunpack.c.h.b16 %v690
    %v844 = vunpack.c.l.b16 %v691
    %v845 = vunpack.c.h.b16 %v691
    %v846 = vunpack.c.l.b16 %v692
    %v847 = vunpack.c.h.b16 %v692
    %v848 = vunpack.c.l.b16 %v693
    %v849 = vunpack.c.h.b16 %v693
    %v850 = vunpack.c.l.b16 %v694
    %v851 = vunpack.c.h.b16 %v694
    %v852 = vunpack.c.l.b16 %v695
    %v853 = vunpack.c.h.b16 %v695
    %v854 = vunpack.c.l.b16 %v696
    %v855 = vunpack.c.h.b16 %v696
    %v856 = vunpack.c.l.b16 %v697
    %v857 = vunpack.c.h.b16 %v697
    %v858 = vunpack.c.l.b16 %v698
    %v859 = vunpack.c.h.b16 %v698
    %v860 = vunpack.c.l.b16 %v699
    %v861 = vunpack.c.h.b16 %v699
    %v862 = vunpack.c.l.b16 %v700
    %v863 = vunpack.c.h.b16 %v700
    %v864 = vunpack.c.l.b16 %v701
    %v865 = vunpack.c.h.b16 %v701
    %v866 = vunpack.c.l.b16 %v702
    %v867 = vunpack.c.h.b16 %v702
    %v868 = vunpack.c.l.b16 %v703
    %v869 = vunpack.c.h.b16 %v703
    %v870 = vunpack.c.l.b16 %v704
    %v871 = vunpack.c.h.b16 %v704
    %v872 = vunpack.c.l.b16 %v705
    %v873 = vunpack.c.h.b16 %v705
    %v874 = vunpack.c.l.b16 %v706
    %v875 = vunpack.c.h.b16 %v706
    %v876 = vunpack.c.l.b16 %v707
    %v877 = vunpack.c.h.b16 %v707
    %v878 = vunpack.c.l.b16 %v708
    %v879 = vunpack.c.h.b16 %v708
    %v880 = vunpack.c.l.b16 %v709
    %v881 = vunpack.c.h.b16 %v709
    %v882 = vunpack.c.l.b16 %v710
    %v883 = vunpack.c.h.b16 %v710
    %v884 = vunpack.c.l.b16 %v711
    %v885 = vunpack.c.h.b16 %v711
    %v886 = vunpack.c.l.b16 %v712
    %v887 = vunpack.c.h.b16 %v712
    %v888 = vunpack.c.l.b16 %v713
    %v889 = vunpack.c.h.b16 %v713
    %v890 = vunpack.c.l.b16 %v714
    %v891 = vunpack.c.h.b16 %v714
    %v892 = vunpack.c.l.b16 %v715
    %v893 = vunpack.c.h.b16 %v715
    %v894 = vunpack.c.l.b16 %v716
    %v895 = vunpack.c.h.b16 %v716
    %v896 = vunpack.c.l.b16 %v717
    %v897 = vunpack.c.h.b16 %v717
    %v898 = vunpack.c.l.b16 %v718
    %v899 = vunpack.c.h.b16 %v718
    %v900 = vunpack.c.l.b16 %v719
    %v901 = vunpack.c.h.b16 %v719
    %v902 = vunpack.c.l.b16 %v720
    %v903 = vunpack.c.h.b16 %v720
    %v904 = vunpack.c.l.b16 %v721
    %v905 = vunpack.c.h.b16 %v721
    %v906 = vunpack.c.l.b16 %v722
    %v907 = vunpack.c.h.b16 %v722
    %v908 = vunpack.c.l.b16 %v723
    %v909 = vunpack.c.h.b16 %v723
    %v910 = vunpack.c.l.b16 %v724
    %v911 = vunpack.c.h.b16 %v724
    %v912 = vunpack.c.l.b16 %v725
    %v913 = vunpack.c.h.b16 %v725
    %v914 = vunpack.c.l.b16 %v726
    %v915 = vunpack.c.h.b16 %v726
    %v916 = vunpack.c.l.b16 %v727
    %v917 = vunpack.c.h.b16 %v727
    %v918 = vunpack.c.l.b16 %v728
    %v919 = vunpack.c.h.b16 %v728
    %v920 = vunpack.c.l.b16 %v729
    %v921 = vunpack.c.h.b16 %v729
    %v922 = vunpack.c.l.b16 %v730
    %v923 = vunpack.c.h.b16 %v730
    %v924 = vunpack.c.l.b16 %v731
    %v925 = vunpack.c.h.b16 %v731
    %v926 = vunpack.c.l.b16 %v732
    %v927 = vunpack.c.h.b16 %v732
    %v928 = vunpack.c.l.b16 %v733
    %v929 = vunpack.c.h.b16 %v733
    %v930 = vunpack.c.l.b16 %v734
    %v931 = vunpack.c.h.b16 %v734
    %v932 = vunpack.c.l.b16 %v735
    %v933 = vunpack.c.h.b16 %v735
    %v934 = vunpack.c.l.b16 %v736
    %v935 = vunpack.c.h.b16 %v736
    %v936 = vunpack.c.l.b16 %v737
    %v937 = vunpack.c.h.b16 %v737
    %v938 = vunpack.c.l.b16 %v738
    %v939 = vunpack.c.h.b16 %v738
    %v940 = vunpack.c.l.b16 %v739
    %v941 = vunpack.c.h.b16 %v739
    %v942 = vunpack.c.l.b16 %v740
    %v943 = vunpack.c.h.b16 %v740
    %v944 = vunpack.c.l.b16 %v741
    %v945 = vunpack.c.h.b16 %v741
    %v946 = vpack.c.b16 %v820, %v818
    %v947 = vpack.c.b16 %v821, %v819
    %v948 = vpack.c.b16 %v824, %v822
    %v949 = vpack.c.b16 %v825, %v823
    %v950 = vpack.c.b16 %v828, %v826
    %v951 = vpack.c.b16 %v829, %v827
    %v952 = vpack.c.b16 %v832, %v830
    %v953 = vpack.c.b16 %v833, %v831
    %v954 = vpack.c.b16 %v836, %v834
    %v955 = vpack.c.b16 %v837, %v835
    %v956 = vpack.c.b16 %v840, %v838
    %v957 = vpack.c.b16 %v841, %v839
    %v958 = vpack.c.b16 %v844, %v842
    %v959 = vpack.c.b16 %v845, %v843
    %v960 = vpack.c.b16 %v848, %v846
    %v961 = vpack.c.b16 %v849, %v847
    %v962 = vpack.c.b16 %v852, %v850
    %v963 = vpack.c.b16 %v853, %v851
    %v964 = vpack.c.b16 %v856, %v854
    %v965 = vpack.c.b16 %v857, %v855
    %v966 = vpack.c.b16 %v860, %v858
    %v967 = vpack.c.b16 %v861, %v859
    %v968 = vpack.c.b16 %v864, %v862
    %v969 = vpack.c.b16 %v865, %v863
    %v970 = vpack.c.b16 %v868, %v866
    %v971 = vpack.c.b16 %v869, %v867
    %v972 = vpack.c.b16 %v872, %v870
    %v973 = vpack.c.b16 %v873, %v871
    %v974 = vpack.c.b16 %v876, %v874
    %v975 = vpack.c.b16 %v877, %v875
    %v976 = vpack.c.b16 %v880, %v878
    %v977 = vpack.c.b16 %v881, %v879
    %v978 = vpack.c.b16 %v884, %v882
    %v979 = vpack.c.b16 %v885, %v883
    %v980 = vpack.c.b16 %v888, %v886
    %v981 = vpack.c.b16 %v889, %v887
    %v982 = vpack.c.b16 %v892, %v890
    %v983 = vpack.c.b16 %v893, %v891
    %v984 = vpack.c.b16 %v896, %v894
    %v985 = vpack.c.b16 %v897, %v895
    %v986 = vpack.c.b16 %v900, %v898
    %v987 = vpack.c.b16 %v901, %v899
    %v988 = vpack.c.b16 %v904, %v902
    %v989 = vpack.c.b16 %v905, %v903
    %v990 = vpack.c.b16 %v908, %v906
    %v991 = vpack.c.b16 %v909, %v907
    %v992 = vpack.c.b16 %v912, %v910
    %v993 = vpack.c.b16 %v913, %v911
    %v994 = vpack.c.b16 %v916, %v914
    %v995 = vpack.c.b16 %v917, %v915
    %v996 = vpack.c.b16 %v920, %v918
    %v997 = vpack.c.b16 %v921, %v919
    %v998 = vpack.c.b16 %v924, %v922
    %v999 = vpack.c.b16 %v925, %v923
    %v1000 = vpack.c.b16 %v928, %v926
    %v1001 = vpack.c.b16 %v929, %v927
    %v1002 = vpack.c.b16 %v932, %v930
    %v1003 = vpack.c.b16 %v933, %v931
    %v1004 = vpack.c.b16 %v936, %v934
    %v1005 = vpack.c.b16 %v937, %v935
    %v1006 = vpack.c.b16 %v940, %v938
    %v1007 = vpack.c.b16 %v941, %v939
    %v1008 = vpack.c.b16 %v944, %v942
    %v1009 = vpack.c.b16 %v945, %v943
    %1074 = vmatprep.subr.bf16.mxu0 %v961
    %1075 = vmatpush1.bf16.msra.mxu0 %v960
    %1076 = vmatprep.subr.bf16.mxu0 %v959
    %1077 = vmatpush1.bf16.msra.mxu0 %v958
    %1078 = vmatprep.subr.bf16.mxu0 %v957
    %1079 = vmatpush1.bf16.msra.mxu0 %v956
    %1080 = vmatprep.subr.bf16.mxu0 %v955
    %1081 = vmatpush1.bf16.msra.mxu0 %v954
    %1082 = vmatprep.subr.bf16.mxu0 %v953
    %1083 = vmatpush1.bf16.msra.mxu0 %v952
    %1084 = vmatprep.subr.bf16.mxu0 %v951
    %1085 = vmatpush1.bf16.msra.mxu0 %v950
    %1086 = vmatprep.subr.bf16.mxu0 %v949
    %1087 = vmatpush1.bf16.msra.mxu0 %v948
    %1088 = vmatprep.subr.bf16.mxu0 %v947
    %1089 = vmatpush1.bf16.msra.mxu0 %v946
    %1090 = vmatprep.subr.bf16.mxu0 %v977
    %1091 = vmatpush2.bf16.msra.mxu0 %v976
    %1092 = vmatprep.subr.bf16.mxu0 %v975
    %1093 = vmatpush2.bf16.msra.mxu0 %v974
    %1094 = vmatprep.subr.bf16.mxu0 %v973
    %1095 = vmatpush2.bf16.msra.mxu0 %v972
    %1096 = vmatprep.subr.bf16.mxu0 %v971
    %1097 = vmatpush2.bf16.msra.mxu0 %v970
    %1098 = vmatprep.subr.bf16.mxu0 %v969
    %1099 = vmatpush2.bf16.msra.mxu0 %v968
    %1100 = vmatprep.subr.bf16.mxu0 %v967
    %1101 = vmatpush2.bf16.msra.mxu0 %v966
    %1102 = vmatprep.subr.bf16.mxu0 %v965
    %1103 = vmatpush2.bf16.msra.mxu0 %v964
    %1104 = vmatprep.subr.bf16.mxu0 %v963
    %1105 = vmatpush2.bf16.msra.mxu0 %v962
    %1106 = vmatprep.mubr.bf16.mxu0 %v675
    %1107 = vmatmul.mubr.bf16.gmra.mxu0 %v674
    %v1108 = vpop.f32.mrf.mxu0
    %v1109 = vadd.f32 %v747, %v1108
    %v1110 = vpop.f32.mrf.mxu0
    %v1111 = vadd.f32 %v751, %v1110
    %v1112 = vpop.f32.mrf.mxu0
    %v1113 = vpop.f32.mrf.mxu0
    %1114 = vdwg.mxu0
    %1115 = vmatprep.subr.bf16.mxu0 %v993
    %1116 = vmatpush1.bf16.msra.mxu0 %v992
    %1117 = vmatprep.subr.bf16.mxu0 %v991
    %1118 = vmatpush1.bf16.msra.mxu0 %v990
    %1119 = vmatprep.subr.bf16.mxu0 %v989
    %1120 = vmatpush1.bf16.msra.mxu0 %v988
    %1121 = vmatprep.subr.bf16.mxu0 %v987
    %1122 = vmatpush1.bf16.msra.mxu0 %v986
    %1123 = vmatprep.subr.bf16.mxu0 %v985
    %1124 = vmatpush1.bf16.msra.mxu0 %v984
    %1125 = vmatprep.subr.bf16.mxu0 %v983
    %1126 = vmatpush1.bf16.msra.mxu0 %v982
    %1127 = vmatprep.subr.bf16.mxu0 %v981
    %1128 = vmatpush1.bf16.msra.mxu0 %v980
    %1129 = vmatprep.subr.bf16.mxu0 %v979
    %1130 = vmatpush1.bf16.msra.mxu0 %v978
    %1131 = vmatprep.subr.bf16.mxu0 %v1009
    %1132 = vmatpush2.bf16.msra.mxu0 %v1008
    %1133 = vmatprep.subr.bf16.mxu0 %v1007
    %1134 = vmatpush2.bf16.msra.mxu0 %v1006
    %1135 = vmatprep.subr.bf16.mxu0 %v1005
    %1136 = vmatpush2.bf16.msra.mxu0 %v1004
    %1137 = vmatprep.subr.bf16.mxu0 %v1003
    %1138 = vmatpush2.bf16.msra.mxu0 %v1002
    %1139 = vmatprep.subr.bf16.mxu0 %v1001
    %1140 = vmatpush2.bf16.msra.mxu0 %v1000
    %1141 = vmatprep.subr.bf16.mxu0 %v999
    %1142 = vmatpush2.bf16.msra.mxu0 %v998
    %1143 = vmatprep.subr.bf16.mxu0 %v997
    %1144 = vmatpush2.bf16.msra.mxu0 %v996
    %1145 = vmatprep.subr.bf16.mxu0 %v995
    %1146 = vmatpush2.bf16.msra.mxu0 %v994
    %1147 = vmatprep.mubr.bf16.mxu0 %v677
    %1148 = vmatmul.mubr.bf16.gmra.mxu0 %v676
    %v1149 = vpop.f32.mrf.mxu0
    %v1150 = vadd.f32 %v1109, %v1149
    %v1151 = vpop.f32.mrf.mxu0
    %v1152 = vadd.f32 %v1111, %v1151
    %v1153 = vpop.f32.mrf.mxu0
    %v1154 = vpop.f32.mrf.mxu0
    %1155 = vdwg.mxu0
    %v1156 = vtanh.pop %v1150
    %v1157 = vtanh.pop %v1152
    %1158 = vst [vmem:[#allocation2] sm:$0xff] %v1156
    %1159 = vst [vmem:[#allocation2 + $0x8] sm:$0xff] %v1157
    // Predicated region
    $region30: #{generator_forward.1} parent=1 // pred_check
      _
    $region31: #{generator_forward.1} parent=1 // pred_check_branch
      %1161 = sbr.rel (0) target = $region33
    $region32: #{generator_forward.1} parent=1 // pred_region
      %s1163 = ssub.s32 256, 256
      %1164 = vsyncadd [#allocation3], %s1163
      %s1166 = sshll.u32 [#allocation2], 4
      %s1167 = int_to_ptr.vmem [resolvable:$true] %s1166
      %1169 = dma.vmem_to_hbm [thread:$0]  %s1167, 256, %s7, [#allocation3]
    $region33: #{generator_forward.1} parent=1 // pred_fallthru
      _
    // Predicated region
    $region34: #{generator_forward.1} parent=1 // pred_check
      _
    $region35: #{generator_forward.1} parent=1 // pred_check_branch
      %1171 = sbr.rel (0) target = $region37
    $region36: #{generator_forward.1} parent=1 // pred_region
      %1172 = dma.done [#allocation3], 256
    $region37: #{generator_forward.1} parent=1 // pred_fallthru
      _
    %1173 = vsyncpa [#allocation3], 1

</llo_original>
